<compile_context>
chip_gen: v6e
topology: v6e:2x2x1
jax: 0.10.0
libtpu: 0.0.40
codegen_flags: <defaults>
</compile_context>

<pallas_src>
import numpy as np
import jax
import jax.numpy as jnp
from jax.experimental import pallas as pl
from jax.experimental.pallas import tpu as pltpu

_LANE = 128


def _round_up(x, m):
    return ((x + m - 1) // m) * m


def _choose_row_tile(s_rows, num_classes):
    # Keep the f32 output tile (C * rows * 128 * 4 bytes) around <= 2 MiB so a
    # double-buffered (input + output) pipeline fits every generation's
    # default scoped VMEM (v5e: 16 MiB, v6e: 32 MiB, v7x: 32 of 64 MiB).
    max_out_bytes = 2 * 1024 * 1024
    max_rows = max(8, max_out_bytes // (num_classes * _LANE * 4))
    max_rows = (max_rows // 8) * 8
    rows = min(_round_up(s_rows, 8), max_rows)
    return max(8, rows)


def _onehot_kernel(classes_ref, target_ref, out_ref):
    # classes_ref: SMEM (C,) int32          (scalar-prefetched)
    # target_ref : VMEM (ROWS, 128) int32   (one lane-dense spatial tile)
    # out_ref    : VMEM (C, ROWS, 128) f32  (all classes for that tile)
    t = target_ref[...]
    num_classes = out_ref.shape[0]
    for c in range(num_classes):  # C is small & static -> unrolled at trace time
        out_ref[c, :, :] = (t == classes_ref[c]).astype(jnp.float32)


def class2d_to_onehot(target, classes):
    """target: (N, H, W) or (H, W) integer array; classes: integer labels.

    Returns (N, C, H, W) or (C, H, W) float32 one-hot, matching the PyTorch
    module (classes are de-duplicated and sorted, like torch.unique()).
    """
    classes_np = np.unique(np.asarray(classes)).astype(np.int32)
    classes = jnp.asarray(classes_np)
    C = int(classes.shape[0])

    squeeze_batch = False
    if target.ndim == 2:
        target = target[None, :, :]
        squeeze_batch = True
    assert target.ndim == 3, "target must be (N,H,W) or (H,W)"

    target = target.astype(jnp.int32)
    N, H, W = target.shape

    # Flatten (H, W) into a lane-dense (rows, 128) plane.
    L = H * W
    S = pl.cdiv(L, _LANE)
    ROWS = _choose_row_tile(S, C)
    S_pad = _round_up(S, ROWS)
    L_pad = S_pad * _LANE

    tflat = target.reshape(N, L)
    if L_pad != L:
        tflat = jnp.pad(tflat, ((0, 0), (0, L_pad - L)))
    t3 = tflat.reshape(N, S_pad, _LANE)

    grid = (N, S_pad // ROWS)

    grid_spec = pltpu.PrefetchScalarGridSpec(
        num_scalar_prefetch=1,
        grid=grid,
        in_specs=[
            pl.BlockSpec(
                (pl.Squeezed(), ROWS, _LANE),
                lambda n, t, cls_ref: (n, t, 0),
            ),
        ],
        out_specs=pl.BlockSpec(
            (pl.Squeezed(), C, ROWS, _LANE),
            lambda n, t, cls_ref: (n, 0, t, 0),
        ),
    )

    out = pl.pallas_call(
        _onehot_kernel,
        out_shape=jax.ShapeDtypeStruct((N, C, S_pad, _LANE), jnp.float32),
        grid_spec=grid_spec,
        compiler_params=pltpu.CompilerParams(
            dimension_semantics=("parallel", "parallel")
        ),
        cost_estimate=pl.CostEstimate(
            flops=N * C * L_pad,
            transcendentals=0,
            bytes_accessed=4 * N * L_pad * (C + 1),
        ),
    )(classes, t3)

    # Drop padded lanes, restore NCHW.
    out = out.reshape(N, C, L_pad)[:, :, :L].reshape(N, C, H, W)
    if squeeze_batch:
        out = out[0]
    return out


def _reference(target, classes):
    classes = jnp.asarray(np.unique(np.asarray(classes)).astype(np.int32))
    if target.ndim == 2:
        return jnp.stack(
            [(target == c).astype(jnp.float32) for c in classes], axis=0
        )
    return jnp.stack(
        [(target == c).astype(jnp.float32) for c in classes], axis=1
    )


if __name__ == "__main__":
    key = jax.random.PRNGKey(0)

    # Deterministic class list as the module's __init__ would receive.
    classes = jnp.arange(4, dtype=jnp.int32)

    N, H, W = 2, 16, 16
    target = jax.random.randint(key, (N, H, W), 0, classes.shape[0], dtype=jnp.int32)

    # 3-D case: (N,H,W) -> (N,C,H,W)
    out3 = class2d_to_onehot(target, classes)
    out3 = jax.block_until_ready(out3)
    ref3 = _reference(target, classes)
    assert out3.shape == (N, classes.shape[0], H, W)
    assert out3.dtype == jnp.float32
    assert jnp.array_equal(out3, ref3)

    # 2-D case: (H,W) -> (C,H,W)
    out2 = class2d_to_onehot(target[0], classes)
    out2 = jax.block_until_ready(out2)
    ref2 = _reference(target[0], classes)
    assert out2.shape == (classes.shape[0], H, W)
    assert jnp.array_equal(out2, ref2)

    print("KERNEL_OK")
</pallas_src>

<mosaic_0001>
module attributes {stable_mosaic.version = 11 : i64} {
  func.func @_onehot_kernel(%arg0: i32, %arg1: i32, %arg2: memref<4xi32, #tpu.memory_space<smem>>, %arg3: memref<1x8x128xi32, #tpu.memory_space<vmem>>, %arg4: memref<1x4x8x128xf32, #tpu.memory_space<vmem>>) attributes {dimension_semantics = [#tpu.dimension_semantics<parallel>, #tpu.dimension_semantics<parallel>], iteration_bounds = array<i64: 2, 1>, scalar_prefetch = 1 : i64, scratch_operands = 0 : i64, tpu.core_type = #tpu.core_type<tc>, window_params = [{transform_indices = @transform_0, window_bounds = array<i64: 1, 8, 128>}, {transform_indices = @transform_1, window_bounds = array<i64: 1, 4, 8, 128>}]} {
    %c0 = arith.constant 0 : index
    %c0_0 = arith.constant 0 : index
    %c0_1 = arith.constant 0 : index
    %0 = vector.load %arg3[%c0, %c0_0, %c0_1] : memref<1x8x128xi32, #tpu.memory_space<vmem>>, vector<1x8x128xi32>
    %1 = vector.shape_cast %0 : vector<1x8x128xi32> to vector<8x128xi32>
    %c0_2 = arith.constant 0 : index
    %2 = memref.load %arg2[%c0_2] : memref<4xi32, #tpu.memory_space<smem>>
    %3 = vector.broadcast %2 : i32 to vector<8x128xi32>
    %4 = arith.cmpi eq, %1, %3 : vector<8x128xi32>
    %5 = arith.extui %4 : vector<8x128xi1> to vector<8x128xi32>
    %6 = arith.sitofp %5 : vector<8x128xi32> to vector<8x128xf32>
    %c0_3 = arith.constant 0 : index
    %c0_4 = arith.constant 0 : index
    %c0_5 = arith.constant 0 : index
    %c0_6 = arith.constant 0 : index
    %7 = vector.load %arg4[%c0_3, %c0_4, %c0_5, %c0_6] : memref<1x4x8x128xf32, #tpu.memory_space<vmem>>, vector<1x1x8x128xf32>
    %8 = vector.shape_cast %7 : vector<1x1x8x128xf32> to vector<8x128xf32>
    %9 = vector.shape_cast %6 : vector<8x128xf32> to vector<1x1x8x128xf32>
    tpu.vector_store %arg4[%c0_3, %c0_4, %c0_5, %c0_6], %9 {strides = array<i32>} : memref<1x4x8x128xf32, #tpu.memory_space<vmem>>, vector<1x1x8x128xf32>,
    %c1 = arith.constant 1 : index
    %10 = memref.load %arg2[%c1] : memref<4xi32, #tpu.memory_space<smem>>
    %11 = vector.broadcast %10 : i32 to vector<8x128xi32>
    %12 = arith.cmpi eq, %1, %11 : vector<8x128xi32>
    %13 = arith.extui %12 : vector<8x128xi1> to vector<8x128xi32>
    %14 = arith.sitofp %13 : vector<8x128xi32> to vector<8x128xf32>
    %c0_7 = arith.constant 0 : index
    %c1_8 = arith.constant 1 : index
    %c0_9 = arith.constant 0 : index
    %c0_10 = arith.constant 0 : index
    %15 = vector.load %arg4[%c0_7, %c1_8, %c0_9, %c0_10] : memref<1x4x8x128xf32, #tpu.memory_space<vmem>>, vector<1x1x8x128xf32>
    %16 = vector.shape_cast %15 : vector<1x1x8x128xf32> to vector<8x128xf32>
    %17 = vector.shape_cast %14 : vector<8x128xf32> to vector<1x1x8x128xf32>
    tpu.vector_store %arg4[%c0_7, %c1_8, %c0_9, %c0_10], %17 {strides = array<i32>} : memref<1x4x8x128xf32, #tpu.memory_space<vmem>>, vector<1x1x8x128xf32>,
    %c2 = arith.constant 2 : index
    %18 = memref.load %arg2[%c2] : memref<4xi32, #tpu.memory_space<smem>>
    %19 = vector.broadcast %18 : i32 to vector<8x128xi32>
    %20 = arith.cmpi eq, %1, %19 : vector<8x128xi32>
    %21 = arith.extui %20 : vector<8x128xi1> to vector<8x128xi32>
    %22 = arith.sitofp %21 : vector<8x128xi32> to vector<8x128xf32>
    %c0_11 = arith.constant 0 : index
    %c2_12 = arith.constant 2 : index
    %c0_13 = arith.constant 0 : index
    %c0_14 = arith.constant 0 : index
    %23 = vector.load %arg4[%c0_11, %c2_12, %c0_13, %c0_14] : memref<1x4x8x128xf32, #tpu.memory_space<vmem>>, vector<1x1x8x128xf32>
    %24 = vector.shape_cast %23 : vector<1x1x8x128xf32> to vector<8x128xf32>
    %25 = vector.shape_cast %22 : vector<8x128xf32> to vector<1x1x8x128xf32>
    tpu.vector_store %arg4[%c0_11, %c2_12, %c0_13, %c0_14], %25 {strides = array<i32>} : memref<1x4x8x128xf32, #tpu.memory_space<vmem>>, vector<1x1x8x128xf32>,
    %c3 = arith.constant 3 : index
    %26 = memref.load %arg2[%c3] : memref<4xi32, #tpu.memory_space<smem>>
    %27 = vector.broadcast %26 : i32 to vector<8x128xi32>
    %28 = arith.cmpi eq, %1, %27 : vector<8x128xi32>
    %29 = arith.extui %28 : vector<8x128xi1> to vector<8x128xi32>
    %30 = arith.sitofp %29 : vector<8x128xi32> to vector<8x128xf32>
    %c0_15 = arith.constant 0 : index
    %c3_16 = arith.constant 3 : index
    %c0_17 = arith.constant 0 : index
    %c0_18 = arith.constant 0 : index
    %31 = vector.load %arg4[%c0_15, %c3_16, %c0_17, %c0_18] : memref<1x4x8x128xf32, #tpu.memory_space<vmem>>, vector<1x1x8x128xf32>
    %32 = vector.shape_cast %31 : vector<1x1x8x128xf32> to vector<8x128xf32>
    %33 = vector.shape_cast %30 : vector<8x128xf32> to vector<1x1x8x128xf32>
    tpu.vector_store %arg4[%c0_15, %c3_16, %c0_17, %c0_18], %33 {strides = array<i32>} : memref<1x4x8x128xf32, #tpu.memory_space<vmem>>, vector<1x1x8x128xf32>,
    return
  }
  func.func @transform_0(%arg0: i32, %arg1: i32, %arg2: memref<4xi32, #tpu.memory_space<smem>>) -> (i32, i32, i32) {
    %c0_i32 = arith.constant 0 : i32
    %c0_i32_0 = arith.constant 0 : i32
    return %arg0, %arg1, %c0_i32 : i32, i32, i32
  }
  func.func @transform_1(%arg0: i32, %arg1: i32, %arg2: memref<4xi32, #tpu.memory_space<smem>>) -> (i32, i32, i32, i32) {
    %c0_i32 = arith.constant 0 : i32
    %c0_i32_0 = arith.constant 0 : i32
    %c0_i32_1 = arith.constant 0 : i32
    return %arg0, %c0_i32, %arg1, %c0_i32_0 : i32, i32, i32, i32
  }
}

</mosaic_0001>

<llo_original>
// kernel: tpu_custom_call.1
$region0: #{tpu_custom_call.1}
  #allocation0 [shape = 'u32[]', space=smem, size = 0x4, offset = 0x4, fixed_abs, tag = 'smem constant byte address 0x4 - core index']
  #allocation1 [shape = 'u32[144,128]{1,0:T(1,128)}', space=vmem, size = 0x12000, scoped, tag = 'internal scratch']
  #allocation2 [shape = 's32[1]{0}', space=sflag, size = 0x4, scoped, tag = 'scoped memory for tpu_custom_call.1']
  #allocation3 [shape = 'u8[512]{0}', space=smem, size = 0x200, scoped, tag = 'prefetched SMEM operand 0']
  %s0 = inlined_call_operand.hbm [shape: s32[4], index: 0, kind: input, shape index: {}]
  %s1 = inlined_call_operand.hbm [shape: s32[2,8,128], index: 1, kind: input, shape index: {}]
  %s2 = inlined_call_operand.hbm [shape: f32[2,4,8,128], index: 2, kind: output, shape index: {}]
  %s3 = sld [smem:[#allocation0]]
  $region41: #{tpu_custom_call.1} parent=0
    _
  %s5 = ssub.s32 1, %s3
  %s6 = scalar_select 0, %s5, %s3
  %8 = dma.hbm_to_smem %s0, 16, [#allocation3], [#allocation2]
  %9 = dma.done [#allocation2], 16
  %10 = sfence
  $region1: #{tpu_custom_call.1} parent=0
    #allocation4 [shape = 'u8[8192]{0}', space=vmem, size = 0x2000, scoped, tag = 'input window, operand 1']
    #allocation5 [shape = 's32[2]{0}', space=sflag, size = 0x8, scoped, tag = 'scoped memory for tpu_custom_call.1']
    #allocation6 [shape = 's32[2]{0}', space=sflag, size = 0x8, scoped, tag = 'scoped memory for tpu_custom_call.1']
    #allocation7 [shape = 'u8[32768]{0}', space=vmem, size = 0x8000, scoped, tag = 'output window, operand 0']
    %11 = vsyncpa [#allocation5], 0
    %s12 = scalar_lea.sflag [#allocation5], 1
    %13 = vsyncpa %s12, 0
    %14 = vsyncpa [#allocation6], 0
    %s15 = scalar_lea.sflag [#allocation6], 1
    %16 = vsyncpa %s15, 0
    loop: start=0, step=1, limit=4
    $region2: #{tpu_custom_call.1} parent=1 // loop_pre_header
      _
    $region3: #{tpu_custom_call.1} parent=1 // loop_header
      %s18 = sphi 0, %s22
      %p19 = scmp.ge.s32.totalorder %s18, 4
      %s25 = sphi 0, %s37
      %s26 = sphi 0, %s33
      %s27 = sphi 0, %s25
      %s28 = sphi 0, %s26
      %s29 = sphi 0, %s27
      %s30 = sphi 0, %s28
      %s42 = sphi 0, %s44
      %s45 = sphi 0, %s42
      %s46 = sphi 0, %s45
      %s62 = sphi 0, %s46
      %s70 = sphi 0, %s72
      %s73 = sphi 0, %s70
      %s74 = sphi 0, %s73
      %s90 = sphi 0, %s74
    $region4: #{tpu_custom_call.1} parent=1 // loop_header_branch
      %21 = sbr.rel (%p19) target = $region8
    $region5: #{tpu_custom_call.1} parent=1 // loop_body
      %s23 = ssub.s32 %s18, 1
      %s24 = ssub.s32 %s18, 2
      %s31 = sadd.s32 1, %s26
      %p32 = scmp.ge.s32.totalorder %s31, 1
      %s33 = scalar_select %p32, 0, %s31
      %s34 = sadd.s32 1, %s25
      %s35 = scalar_select %p32, %s34, %s25
      %p36 = scmp.ge.s32.totalorder %s35, 2
      %s37 = scalar_select %p36, 0, %s35
      %s38 = ssub.s32 %s25, %s37
      %s39 = ssub.s32 %s26, %s33
      %s40 = sor.u32 %s38, %s39
      %p41 = scmp.eq.s32.totalorder %s40, 0
      %s43 = sadd.s32 %s42, 1
      %s44 = scalar_select %p41, %s42, %s43
      %p47 = pneg %p41
      %p48 = scmp.eq.s32.totalorder %s18, 1
      %p49 = por %p47, %p48
      %p50 = scmp.ne.s32.totalorder %s42, %s45
      %p51 = scmp.eq.s32.totalorder %s18, 0
      %p52 = por %p50, %p51
      %p53 = scmp.ne.s32.totalorder %s42, %s45
      %p54 = scmp.eq.s32.totalorder %s23, 1
      %p55 = por %p53, %p54
      %p56 = scmp.ne.s32.totalorder %s45, %s46
      %p57 = scmp.eq.s32.totalorder %s23, 0
      %p58 = por %p56, %p57
      %p59 = scmp.ne.s32.totalorder %s45, %s46
      %p60 = scmp.eq.s32.totalorder %s24, 1
      %p61 = por %p59, %p60
      %p63 = scmp.ne.s32.totalorder %s46, %s62
      %p64 = scmp.eq.s32.totalorder %s24, 0
      %p65 = por %p63, %p64
      %s66 = ssub.s32 %s25, %s37
      %s67 = ssub.s32 %s26, %s33
      %s68 = sor.u32 %s66, %s67
      %p69 = scmp.eq.s32.totalorder %s68, 0
      %s71 = sadd.s32 %s70, 1
      %s72 = scalar_select %p69, %s70, %s71
      %p75 = pneg %p69
      %p76 = scmp.eq.s32.totalorder %s18, 1
      %p77 = por %p75, %p76
      %p78 = scmp.ne.s32.totalorder %s70, %s73
      %p79 = scmp.eq.s32.totalorder %s18, 0
      %p80 = por %p78, %p79
      %p81 = scmp.ne.s32.totalorder %s70, %s73
      %p82 = scmp.eq.s32.totalorder %s23, 1
      %p83 = por %p81, %p82
      %p84 = scmp.ne.s32.totalorder %s73, %s74
      %p85 = scmp.eq.s32.totalorder %s23, 0
      %p86 = por %p84, %p85
      %p87 = scmp.ne.s32.totalorder %s73, %s74
      %p88 = scmp.eq.s32.totalorder %s24, 1
      %p89 = por %p87, %p88
      %p91 = scmp.ne.s32.totalorder %s74, %s90
      %p92 = scmp.eq.s32.totalorder %s24, 0
      %p93 = por %p91, %p92
      %p94 = scmp.le.s32.totalorder 1, %s18
      %p95 = scmp.lt.s32.totalorder %s18, 3
      %p96 = pnand %p94, %p95
      %p97 = pneg %p96
      // Predicated region
      $region9: #{tpu_custom_call.1} parent=5 // pred_check
        _
      $region10: #{tpu_custom_call.1} parent=5 // pred_check_branch
        %99 = sbr.rel (%p96) target = $region12
      $region11: #{tpu_custom_call.1} parent=5 // pred_region
        %s100 = ssub.s32 %s18, 1
      $region12: #{tpu_custom_call.1} parent=5 // pred_fallthru
        _
      %p101 = scmp.lt.s32.totalorder %s18, 2
      // Predicated region
      $region13: #{tpu_custom_call.1} parent=5 // pred_check
        %p102 = pneg %p101
      $region14: #{tpu_custom_call.1} parent=5 // pred_check_branch
        %104 = sbr.rel (%p102) target = $region16
      $region15: #{tpu_custom_call.1} parent=5 // pred_region
        // Predicated region
        $region17: #{tpu_custom_call.1} parent=15 // pred_check
          %p105 = pneg %p52
        $region18: #{tpu_custom_call.1} parent=15 // pred_check_branch
          %107 = sbr.rel (%p105) target = $region20
        $region19: #{tpu_custom_call.1} parent=15 // pred_region
          %s108 = sand.u32 %s42, 1
          %s109 = scalar_lea.sflag [#allocation5], %s108
          %s110 = sand.u32 %s42, 1
          %s111 = smul.addr %s110, 8
          %s112 = scalar_lea.vmem [#allocation4], %s111
          %s114 = ssub.s32 128, 128
          %115 = vsyncadd %s109, %s114
          %s116 = sadd.s32 %s26, %s25
          %s117 = smul.addr %s116, 128
          %s118 = scalar_lea.hbm %s1, %s117
          %s120 = sshll.u32 %s112, 4
          %s121 = int_to_ptr.vmem [resolvable:$true] %s120
          %123 = dma.hbm_to_vmem [thread:$0]  %s118, 128, %s121, %s109
        $region20: #{tpu_custom_call.1} parent=15 // pred_fallthru
          _
      $region16: #{tpu_custom_call.1} parent=5 // pred_fallthru
        _
      %p124 = scmp.le.s32.totalorder 1, %s18
      %p125 = scmp.lt.s32.totalorder %s18, 3
      %p126 = pnand %p124, %p125
      %p127 = pneg %p126
      // Predicated region
      $region21: #{tpu_custom_call.1} parent=5 // pred_check
        _
      $region22: #{tpu_custom_call.1} parent=5 // pred_check_branch
        %129 = sbr.rel (%p126) target = $region24
      $region23: #{tpu_custom_call.1} parent=5 // pred_region
        %s130 = ssub.s32 %s18, 1
        %s131 = sand.u32 %s45, 1
        %s132 = scalar_lea.sflag [#allocation5], %s131
        %s133 = sand.u32 %s45, 1
        %s134 = smul.addr %s133, 8
        %s135 = scalar_lea.vmem [#allocation4], %s134
        // Predicated region
        $region25: #{tpu_custom_call.1} parent=23 // pred_check
          %p136 = pneg %p58
        $region26: #{tpu_custom_call.1} parent=23 // pred_check_branch
          %138 = sbr.rel (%p136) target = $region28
        $region27: #{tpu_custom_call.1} parent=23 // pred_region
          %139 = dma.done %s132, 128
        $region28: #{tpu_custom_call.1} parent=23 // pred_fallthru
          _
        %s140 = sand.u32 %s45, 1
        %s141 = scalar_lea.sflag [#allocation5], %s140
        %s142 = sand.u32 %s45, 1
        %s143 = smul.addr %s142, 8
        %s144 = scalar_lea.vmem [#allocation4], %s143
        %p145 = pneg %p58
        %p146 = pneg %p55
        %p147 = pneg %p86
        %p148 = pneg %p83
        %s149 = sand.u32 %s73, 1
        %s150 = scalar_lea.sflag [#allocation6], %s149
        %s151 = sand.u32 %s73, 1
        %s152 = smul.addr %s151, 32
        %s153 = scalar_lea.vmem [#allocation7], %s152
        %v154 = vld [vmem:[%s135] sm:$0xff]
        %s155 = sld [smem:[#allocation3]]
        %v156 = vstv %s155
        %vm157 = vcmp.eq.s32.totalorder %v154, %v156
        %v158 = vsel %vm157, 1, 0
        %v159 = vcvt.s32.f32 %v158
        %160 = vst [vmem:[%s153] sm:$0xff] %v159
        %s161 = sld [smem:[#allocation3 + $0x1]]
        %v162 = vstv %s161
        %vm163 = vcmp.eq.s32.totalorder %v154, %v162
        %v164 = vsel %vm163, 1, 0
        %v165 = vcvt.s32.f32 %v164
        %s166 = scalar_lea.vmem %s153, 8 [#allocation7]
        %167 = vst [vmem:[%s166] sm:$0xff] %v165
        %s168 = sld [smem:[#allocation3 + $0x2]]
        %v169 = vstv %s168
        %vm170 = vcmp.eq.s32.totalorder %v154, %v169
        %v171 = vsel %vm170, 1, 0
        %v172 = vcvt.s32.f32 %v171
        %s173 = scalar_lea.vmem %s153, 16 [#allocation7]
        %174 = vst [vmem:[%s173] sm:$0xff] %v172
        %s175 = sld [smem:[#allocation3 + $0x3]]
        %v176 = vstv %s175
        %vm177 = vcmp.eq.s32.totalorder %v154, %v176
        %v178 = vsel %vm177, 1, 0
        %v179 = vcvt.s32.f32 %v178
        %s180 = scalar_lea.vmem %s153, 24 [#allocation7]
        %181 = vst [vmem:[%s180] sm:$0xff] %v179
        %s182 = sand.u32 %s73, 1
        %s183 = scalar_lea.sflag [#allocation6], %s182
        %s184 = sand.u32 %s73, 1
        %s185 = smul.addr %s184, 32
        %s186 = scalar_lea.vmem [#allocation7], %s185
        // Predicated region
        $region29: #{tpu_custom_call.1} parent=23 // pred_check
          %p187 = pneg %p83
        $region30: #{tpu_custom_call.1} parent=23 // pred_check_branch
          %189 = sbr.rel (%p187) target = $region32
        $region31: #{tpu_custom_call.1} parent=23 // pred_region
          %s191 = ssub.s32 512, 512
          %192 = vsyncadd %s183, %s191
          %s193 = smul.addr %s27, 4
          %s194 = sadd.s32 %s28, %s193
          %s195 = smul.addr %s194, 128
          %s196 = scalar_lea.hbm %s2, %s195
          %s197 = sshll.u32 %s186, 4
          %s198 = int_to_ptr.vmem [resolvable:$true] %s197
          %203 = dma.vmem_to_hbm [thread:$0]  %s198, 512, %s196, %s183, 128, 128, 8
        $region32: #{tpu_custom_call.1} parent=23 // pred_fallthru
          _
      $region24: #{tpu_custom_call.1} parent=5 // pred_fallthru
        _
      %p204 = scmp.le.s32.totalorder 2, %s18
      // Predicated region
      $region33: #{tpu_custom_call.1} parent=5 // pred_check
        %p205 = pneg %p204
      $region34: #{tpu_custom_call.1} parent=5 // pred_check_branch
        %207 = sbr.rel (%p205) target = $region36
      $region35: #{tpu_custom_call.1} parent=5 // pred_region
        %s208 = ssub.s32 %s18, 2
        // Predicated region
        $region37: #{tpu_custom_call.1} parent=35 // pred_check
          %p209 = pneg %p89
        $region38: #{tpu_custom_call.1} parent=35 // pred_check_branch
          %211 = sbr.rel (%p209) target = $region40
        $region39: #{tpu_custom_call.1} parent=35 // pred_region
          %s212 = sand.u32 %s74, 1
          %s213 = scalar_lea.sflag [#allocation6], %s212
          %s214 = sand.u32 %s74, 1
          %s215 = smul.addr %s214, 32
          %s216 = scalar_lea.vmem [#allocation7], %s215
          %217 = dma.done %s213, 512
        $region40: #{tpu_custom_call.1} parent=35 // pred_fallthru
          _
      $region36: #{tpu_custom_call.1} parent=5 // pred_fallthru
        _
    $region6: #{tpu_custom_call.1} parent=1 // loop_footer
      %s22 = sadd.s32 1, %s18
    $region7: #{tpu_custom_call.1} parent=1 // loop_footer_branch
      %17 = sbr.rel target = $region3
    $region8: #{tpu_custom_call.1} parent=1 // loop_exit
      _
    %218 = vsyncpa [#allocation5], 1
    %s219 = scalar_lea.sflag [#allocation5], 1
    %220 = vsyncpa %s219, 1
    %221 = vsyncpa [#allocation6], 1
    %s222 = scalar_lea.sflag [#allocation6], 1
    %223 = vsyncpa %s222, 1

</llo_original>
